<compile_context>
chip_gen: v7x
topology: tpu7x:2x2x1
jax: 0.10.0
libtpu: 0.0.40
codegen_flags: <defaults>
</compile_context>

<pallas_src>
import jax
import jax.numpy as jnp
from jax import lax
from jax.experimental import pallas as pl
from jax.experimental.pallas import tpu as pltpu


def _heads_kernel(x_ref, w1_ref, b1_ref, w2_ref, b2_ref, o_ref):
    # x_ref:  (tm, H)  row tile of tokens (bf16 or f32, MXU operand dtype)
    # w1_ref: (H, H)   dense weight, pre-transposed to (in, out), MXU dtype
    # b1_ref: (1, H)   dense bias, f32
    # w2_ref: (1, H)   prediction weight row, f32
    # b2_ref: (1, 1)   prediction bias, f32
    # o_ref:  (1, tm)  lane-dense logits for this row tile
    y = jnp.dot(x_ref[...], w1_ref[...], preferred_element_type=jnp.float32)

    # bias_gelu (uses the literal constant 1.41421, not exact sqrt(2)); f32 math.
    h = y + b1_ref[...]
    h = h * 0.5 * (1.0 + lax.erf(h / 1.41421))

    # Prediction head (out_features=1): VPU multiply + lane reduction (XLU),
    # leaving the MXU free and producing a lane-dense (1, tm) store.
    z = jnp.sum(h * w2_ref[...], axis=-1) + b2_ref[0, 0]     # (tm,)
    o_ref[...] = z.reshape(1, -1).astype(o_ref.dtype)


def electra_discriminator_heads(hidden_states, w1, b1, w2, b2, *, tm=256,
                                mxu_dtype=jnp.bfloat16):
    """hidden_states: [B, S, H]; w1: [H, H] (out, in); b1: [H];
    w2: [1, H] (out, in); b2: [1].  Returns [B, S, 1]."""
    B, S, H = hidden_states.shape
    M = B * S

    # Row tile: large and lane-aligned (multiple of 128) so the (1, tm) output
    # block is lane-dense; fall back to one full-size block for tiny inputs.
    if M <= tm:
        tm_eff, M_pad = M, M
    else:
        tm_eff = max(128, (min(tm, M) // 128) * 128)
        M_pad = pl.cdiv(M, tm_eff) * tm_eff

    x = hidden_states.reshape(M, H)
    if M_pad != M:
        x = jnp.pad(x, ((0, M_pad - M), (0, 0)))

    x = x.astype(mxu_dtype)                      # MXU operand dtype (default bf16)
    w1_t = w1.T.astype(mxu_dtype)                # (H_in, H_out)
    b1_r = b1.reshape(1, H).astype(jnp.float32)  # bias + GELU stay f32
    w2_r = w2.reshape(1, H).astype(jnp.float32)  # used on the VPU, keep f32
    b2_r = b2.reshape(1, 1).astype(jnp.float32)

    grid = (M_pad // tm_eff,)

    # Grid-invariant blocks (weights / biases) do not need double-buffering.
    const = dict(pipeline_mode=pl.Buffered(1))

    # Explicit VMEM budget: single-buffered W1 + double-buffered x tiles + misc,
    # with headroom, capped well below v7x's 64 MiB physical VMEM.
    itemsize = jnp.dtype(mxu_dtype).itemsize
    vmem_est = (H * H * itemsize            # W1 (single-buffered)
                + 2 * tm_eff * H * itemsize  # x tiles (double-buffered)
                + 2 * tm_eff * 4             # output tiles
                + 3 * H * 4 + 256)           # biases / prediction row
    vmem_limit = int(min(max(2 * vmem_est + (4 << 20), 32 << 20), 48 << 20))

    out = pl.pallas_call(
        _heads_kernel,
        out_shape=jax.ShapeDtypeStruct((1, M_pad), hidden_states.dtype),
        grid_spec=pltpu.PrefetchScalarGridSpec(
            num_scalar_prefetch=0,
            grid=grid,
            in_specs=[
                pl.BlockSpec((tm_eff, H), lambda i: (i, 0)),
                pl.BlockSpec((H, H), lambda i: (0, 0), **const),
                pl.BlockSpec((1, H), lambda i: (0, 0), **const),
                pl.BlockSpec((1, H), lambda i: (0, 0), **const),
                pl.BlockSpec((1, 1), lambda i: (0, 0), **const),
            ],
            out_specs=pl.BlockSpec((1, tm_eff), lambda i: (0, i)),
        ),
        compiler_params=pltpu.CompilerParams(
            dimension_semantics=("parallel",),   # row axis shards across TCs (v7x)
            vmem_limit_bytes=vmem_limit,
        ),
    )(x, w1_t, b1_r, w2_r, b2_r)

    return out.reshape(M_pad)[:M].reshape(B, S, 1)


def _reference(hidden_states, w1, b1, w2, b2, *, mxu_dtype=jnp.bfloat16):
    """Pure-JAX reference mirroring the PyTorch semantics (same operand dtypes)."""
    xc = hidden_states.astype(mxu_dtype)
    y = jnp.einsum("bsh,oh->bso", xc, w1.astype(mxu_dtype),
                   preferred_element_type=jnp.float32)
    h = y + b1.astype(jnp.float32)
    h = h * 0.5 * (1.0 + lax.erf(h / 1.41421))
    z = jnp.einsum("bsh,oh->bso", h, w2.astype(jnp.float32),
                   preferred_element_type=jnp.float32) + b2
    return z.astype(hidden_states.dtype)


if __name__ == "__main__":
    B, S, H = 2, 8, 32

    key = jax.random.PRNGKey(0)
    k_x, k_w1, k_b1, k_w2 = jax.random.split(key, 4)

    hidden_states = jax.random.normal(k_x, (B, S, H), dtype=jnp.float32)

    # Deterministic parameter init (shapes match the PyTorch module):
    #   dense:            weight (H, H), bias (H,)   -- kaiming-ish uniform
    #   dense_prediction: weight (1, H), bias (1,)   -- normal(std=0.02), zeros
    bound = 1.0 / (H ** 0.5)
    w1 = jax.random.uniform(k_w1, (H, H), jnp.float32, -bound, bound)
    b1 = jax.random.uniform(k_b1, (H,), jnp.float32, -bound, bound)
    w2 = 0.02 * jax.random.normal(k_w2, (1, H), dtype=jnp.float32)
    b2 = jnp.zeros((1,), dtype=jnp.float32)

    # Exact-precision path (f32 MXU operands): tight check.
    out_f32 = electra_discriminator_heads(hidden_states, w1, b1, w2, b2,
                                          mxu_dtype=jnp.float32)
    out_f32 = jax.block_until_ready(out_f32)
    ref_f32 = _reference(hidden_states, w1, b1, w2, b2, mxu_dtype=jnp.float32)
    assert out_f32.shape == (B, S, 1), out_f32.shape
    assert jnp.allclose(out_f32, ref_f32, atol=1e-5, rtol=1e-5), "f32 mismatch"

    # Default fast path (bf16 MXU operands, f32 accumulation + GELU).
    out_bf = electra_discriminator_heads(hidden_states, w1, b1, w2, b2)
    out_bf = jax.block_until_ready(out_bf)
    ref_bf = _reference(hidden_states, w1, b1, w2, b2, mxu_dtype=jnp.bfloat16)
    assert out_bf.shape == (B, S, 1), out_bf.shape
    assert jnp.allclose(out_bf, ref_bf, atol=2e-3, rtol=2e-3), "bf16 mismatch"
    assert jnp.allclose(out_bf, ref_f32, atol=5e-2, rtol=5e-2), "bf16 drift vs f32"

    print("KERNEL_OK")
</pallas_src>

<mosaic_0001>
module attributes {stable_mosaic.version = 11 : i64} {
  func.func @_heads_kernel(%arg0: i32, %arg1: memref<16x32xf32, #tpu.memory_space<vmem>>, %arg2: memref<32x32xf32, #tpu.memory_space<vmem>>, %arg3: memref<1x32xf32, #tpu.memory_space<vmem>>, %arg4: memref<1x32xf32, #tpu.memory_space<vmem>>, %arg5: memref<1x1xf32, #tpu.memory_space<vmem>>, %arg6: memref<1x16xf32, #tpu.memory_space<vmem>>) attributes {dimension_semantics = [#tpu.dimension_semantics<parallel>], iteration_bounds = array<i64: 1>, scalar_prefetch = 0 : i64, scratch_operands = 0 : i64, tpu.core_type = #tpu.core_type<tc>, window_params = [{transform_indices = @transform_0, window_bounds = array<i64: 16, 32>}, {pipeline_mode = #tpu.pipeline_mode<synchronous>, transform_indices = @transform_1, window_bounds = array<i64: 32, 32>}, {pipeline_mode = #tpu.pipeline_mode<synchronous>, transform_indices = @transform_2, window_bounds = array<i64: 1, 32>}, {pipeline_mode = #tpu.pipeline_mode<synchronous>, transform_indices = @transform_3, window_bounds = array<i64: 1, 32>}, {pipeline_mode = #tpu.pipeline_mode<synchronous>, transform_indices = @transform_4, window_bounds = array<i64: 1, 1>}, {transform_indices = @transform_5, window_bounds = array<i64: 1, 16>}]} {
    %c0 = arith.constant 0 : index
    %c0_0 = arith.constant 0 : index
    %0 = vector.load %arg1[%c0, %c0_0] : memref<16x32xf32, #tpu.memory_space<vmem>>, vector<16x32xf32>
    %c0_1 = arith.constant 0 : index
    %c0_2 = arith.constant 0 : index
    %1 = vector.load %arg2[%c0_1, %c0_2] : memref<32x32xf32, #tpu.memory_space<vmem>>, vector<32x32xf32>
    %cst = arith.constant dense<0.000000e+00> : vector<16x32xf32>
    %2 = tpu.matmul %0, %1, %cst {dimension_numbers = #tpu.dot_dimension_numbers<[1], [0], [0], [1], [0, 0, 1, 1], [], []>} : vector<16x32xf32>, vector<32x32xf32>, vector<16x32xf32> -> vector<16x32xf32>
    %c0_3 = arith.constant 0 : index
    %c0_4 = arith.constant 0 : index
    %3 = vector.load %arg3[%c0_3, %c0_4] : memref<1x32xf32, #tpu.memory_space<vmem>>, vector<1x32xf32>
    %4 = vector.broadcast %3 : vector<1x32xf32> to vector<16x32xf32>
    %5 = arith.addf %2, %4 : vector<16x32xf32>
    %cst_5 = arith.constant 5.000000e-01 : f32
    %6 = vector.broadcast %cst_5 : f32 to vector<16x32xf32>
    %7 = arith.mulf %5, %6 : vector<16x32xf32>
    %cst_6 = arith.constant 1.414210e+00 : f32
    %8 = vector.broadcast %cst_6 : f32 to vector<16x32xf32>
    %9 = arith.divf %5, %8 : vector<16x32xf32>
    %10 = math.erf %9 : vector<16x32xf32>
    %cst_7 = arith.constant 1.000000e+00 : f32
    %11 = vector.broadcast %cst_7 : f32 to vector<16x32xf32>
    %12 = arith.addf %11, %10 : vector<16x32xf32>
    %13 = arith.mulf %7, %12 : vector<16x32xf32>
    %c0_8 = arith.constant 0 : index
    %c0_9 = arith.constant 0 : index
    %14 = vector.load %arg4[%c0_8, %c0_9] : memref<1x32xf32, #tpu.memory_space<vmem>>, vector<1x32xf32>
    %15 = vector.broadcast %14 : vector<1x32xf32> to vector<16x32xf32>
    %16 = arith.mulf %13, %15 : vector<16x32xf32>
    %cst_10 = arith.constant dense<0.000000e+00> : vector<16xf32>
    %17 = vector.multi_reduction <add>, %16, %cst_10 [1] : vector<16x32xf32> to vector<16xf32>
    %c0_11 = arith.constant 0 : index
    %c0_12 = arith.constant 0 : index
    %18 = vector.load %arg5[%c0_11, %c0_12] : memref<1x1xf32, #tpu.memory_space<vmem>>, vector<1x1xf32>
    %19 = vector.extract %18[0, 0] : f32 from vector<1x1xf32>
    %20 = vector.broadcast %19 : f32 to vector<16xf32>
    %21 = arith.addf %17, %20 : vector<16xf32>
    %22 = vector.shape_cast %21 : vector<16xf32> to vector<1x16xf32>
    %c0_13 = arith.constant 0 : index
    %c0_14 = arith.constant 0 : index
    %23 = vector.load %arg6[%c0_13, %c0_14] : memref<1x16xf32, #tpu.memory_space<vmem>>, vector<1x16xf32>
    tpu.vector_store %arg6[%c0_13, %c0_14], %22 {strides = array<i32>} : memref<1x16xf32, #tpu.memory_space<vmem>>, vector<1x16xf32>,
    return
  }
  func.func @transform_0(%arg0: i32) -> (i32, i32) {
    %c0_i32 = arith.constant 0 : i32
    %c0_i32_0 = arith.constant 0 : i32
    return %arg0, %c0_i32 : i32, i32
  }
  func.func @transform_1(%arg0: i32) -> (i32, i32) {
    %c0_i32 = arith.constant 0 : i32
    %c0_i32_0 = arith.constant 0 : i32
    %c0_i32_1 = arith.constant 0 : i32
    return %c0_i32, %c0_i32_0 : i32, i32
  }
  func.func @transform_2(%arg0: i32) -> (i32, i32) {
    %c0_i32 = arith.constant 0 : i32
    %c0_i32_0 = arith.constant 0 : i32
    %c0_i32_1 = arith.constant 0 : i32
    return %c0_i32, %c0_i32_0 : i32, i32
  }
  func.func @transform_3(%arg0: i32) -> (i32, i32) {
    %c0_i32 = arith.constant 0 : i32
    %c0_i32_0 = arith.constant 0 : i32
    %c0_i32_1 = arith.constant 0 : i32
    return %c0_i32, %c0_i32_0 : i32, i32
  }
  func.func @transform_4(%arg0: i32) -> (i32, i32) {
    %c0_i32 = arith.constant 0 : i32
    %c0_i32_0 = arith.constant 0 : i32
    %c0_i32_1 = arith.constant 0 : i32
    return %c0_i32, %c0_i32_0 : i32, i32
  }
  func.func @transform_5(%arg0: i32) -> (i32, i32) {
    %c0_i32 = arith.constant 0 : i32
    %c0_i32_0 = arith.constant 0 : i32
    return %c0_i32, %arg0 : i32, i32
  }
}

</mosaic_0001>

<llo_original>
// kernel: tpu_custom_call.1
$region0: #{tpu_custom_call.1}
  #allocation0 [shape = 'u32[]', space=smem, size = 0x4, offset = 0x4, fixed_abs, tag = 'smem constant byte address 0x4 - core index']
  #allocation1 [shape = 'u32[144,128]{1,0:T(1,128)}', space=vmem, size = 0x12000, scoped, tag = 'internal scratch']
  #allocation2 [shape = 'f32[1,1]{1,0:T(1,128)S(1)}', space=vmem, size = 0x200, scoped, tag = 'scoped memory for tpu_custom_call.1']
  %s0 = inlined_call_operand.hbm [shape: f32[16,32], index: 0, kind: input, shape index: {}]
  %s1 = inlined_call_operand.hbm [shape: f32[32,32], index: 1, kind: input, shape index: {}]
  %s2 = inlined_call_operand.vmem [shape: f32[1,32], index: 2, kind: input, shape index: {}]
  %s3 = inlined_call_operand.vmem [shape: f32[1,32], index: 3, kind: input, shape index: {}]
  %s4 = inlined_call_operand.<no memory space> [shape: f32[1,1], index: 4, kind: input, shape index: {}]
  %s5 = inlined_call_operand.hbm [shape: f32[1,16], index: 5, kind: output, shape index: {}]
  %s6 = sld [smem:[#allocation0]]
  $region38: #{tpu_custom_call.1} parent=0
    _
  %s8 = ssub.s32 1, %s6
  %s9 = scalar_select 0, %s8, %s6
  %v10 = vstv %s4
  %11 = vst [vmem:[#allocation2] sm:$0x1] %v10
  $region1: #{tpu_custom_call.1} parent=0
    #allocation3 [shape = 'u8[8192]{0}', space=vmem, size = 0x2000, scoped, tag = 'input window, operand 0, single buffered']
    #allocation4 [shape = 's32[1]{0}', space=sflag, size = 0x4, scoped, tag = 'scoped memory for tpu_custom_call.1']
    #allocation5 [shape = 's32[1]{0}', space=sflag, size = 0x4, scoped, tag = 'scoped memory for tpu_custom_call.1']
    #allocation6 [shape = 'u8[16384]{0}', space=vmem, size = 0x4000, scoped, tag = 'input window, operand 1, single buffered']
    #allocation7 [shape = 's32[1]{0}', space=sflag, size = 0x4, scoped, tag = 'scoped memory for tpu_custom_call.1']
    #allocation8 [shape = 'u8[512]{0}', space=vmem, size = 0x400, scoped, tag = 'output window, operand 0, single buffered']
    %12 = vsyncpa [#allocation4], 0
    %13 = vsyncpa [#allocation7], 0
    %14 = vsyncpa [#allocation5], 0
    // Predicated region
    $region2: #{tpu_custom_call.1} parent=1 // pred_check
      _
    $region3: #{tpu_custom_call.1} parent=1 // pred_check_branch
      %16 = sbr.rel (0) target = $region5
    $region4: #{tpu_custom_call.1} parent=1 // pred_region
      %s18 = ssub.s32 256, 256
      %19 = vsyncadd [#allocation4], %s18
      %s20 = sshll.u32 [#allocation3], 4
      %s21 = int_to_ptr.vmem [resolvable:$true] %s20
      %26 = dma.hbm_to_vmem [thread:$0]  %s0, 256, %s21, [#allocation4], 128, 128, 8
    $region5: #{tpu_custom_call.1} parent=1 // pred_fallthru
      _
    // Predicated region
    $region6: #{tpu_custom_call.1} parent=1 // pred_check
      _
    $region7: #{tpu_custom_call.1} parent=1 // pred_check_branch
      %28 = sbr.rel (0) target = $region9
    $region8: #{tpu_custom_call.1} parent=1 // pred_region
      %s30 = ssub.s32 512, 512
      %31 = vsyncadd [#allocation7], %s30
      %s32 = sshll.u32 [#allocation6], 4
      %s33 = int_to_ptr.vmem [resolvable:$true] %s32
      %38 = dma.hbm_to_vmem [thread:$0]  %s1, 512, %s33, [#allocation7], 128, 128, 8
    $region9: #{tpu_custom_call.1} parent=1 // pred_fallthru
      _
    // Predicated region
    $region10: #{tpu_custom_call.1} parent=1 // pred_check
      _
    $region11: #{tpu_custom_call.1} parent=1 // pred_check_branch
      %40 = sbr.rel (0) target = $region13
    $region12: #{tpu_custom_call.1} parent=1 // pred_region
      _
    $region13: #{tpu_custom_call.1} parent=1 // pred_fallthru
      _
    // Predicated region
    $region14: #{tpu_custom_call.1} parent=1 // pred_check
      _
    $region15: #{tpu_custom_call.1} parent=1 // pred_check_branch
      %42 = sbr.rel (0) target = $region17
    $region16: #{tpu_custom_call.1} parent=1 // pred_region
      _
    $region17: #{tpu_custom_call.1} parent=1 // pred_fallthru
      _
    // Predicated region
    $region18: #{tpu_custom_call.1} parent=1 // pred_check
      _
    $region19: #{tpu_custom_call.1} parent=1 // pred_check_branch
      %44 = sbr.rel (0) target = $region21
    $region20: #{tpu_custom_call.1} parent=1 // pred_region
      _
    $region21: #{tpu_custom_call.1} parent=1 // pred_fallthru
      _
    // Predicated region
    $region22: #{tpu_custom_call.1} parent=1 // pred_check
      _
    $region23: #{tpu_custom_call.1} parent=1 // pred_check_branch
      %46 = sbr.rel (0) target = $region25
    $region24: #{tpu_custom_call.1} parent=1 // pred_region
      %47 = dma.done [#allocation4], 256
    $region25: #{tpu_custom_call.1} parent=1 // pred_fallthru
      _
    // Predicated region
    $region26: #{tpu_custom_call.1} parent=1 // pred_check
      _
    $region27: #{tpu_custom_call.1} parent=1 // pred_check_branch
      %49 = sbr.rel (0) target = $region29
    $region28: #{tpu_custom_call.1} parent=1 // pred_region
      %50 = dma.done [#allocation7], 512
    $region29: #{tpu_custom_call.1} parent=1 // pred_fallthru
      _
    %v51 = vld [vmem:[#allocation3] sm:$0xff]
    %v52 = vld [vmem:[#allocation3 + $0x8] sm:$0xff]
    %v53 = vld [vmem:[#allocation6] sm:$0xff]
    %v54 = vld [vmem:[#allocation6 + $0x8] sm:$0xff]
    %v55 = vld [vmem:[#allocation6 + $0x10] sm:$0xff]
    %v56 = vld [vmem:[#allocation6 + $0x18] sm:$0xff]
    %v57 = vld [vmem:[%s2] sm:$0x1]
    %v59 = vlaneseq
    %v60 = vshrl.u32 %v59, 7
    %v61 = vsub.s32 0, %v60
    %v62 = vrot.slane %v57, %v61
    %vm64 = vcmask 261120
    %v66 = vsel %vm64, %v51, 0
    %v69 = vsel %vm64, %v52, 0
    %71 = vmatprep.subr.mxu0 0.0
    %72 = vmatpush1.msra.mxu0 %v53
    %73 = vmatprep.subr.mxu0 0.0
    %74 = vmatpush1.msra.mxu0 %v54
    %75 = vmatprep.subr.mxu0 0.0
    %76 = vmatpush1.msra.mxu0 %v55
    %77 = vmatprep.subr.mxu0 0.0
    %78 = vmatpush1.msra.mxu0 %v56
    %79 = vmatprep.subr.mxu0 0.0
    %80 = vmatpush1.msra.mxu0 0.0
    %81 = vmatprep.subr.mxu0 0.0
    %82 = vmatpush1.msra.mxu0 0.0
    %83 = vmatprep.subr.mxu0 0.0
    %84 = vmatpush1.msra.mxu0 0.0
    %85 = vmatprep.subr.mxu0 0.0
    %86 = vmatpush1.msra.mxu0 0.0
    %87 = vmatprep.subr.mxu0 0.0
    %88 = vmatpush1.msra.mxu0 0.0
    %89 = vmatprep.subr.mxu0 0.0
    %90 = vmatpush1.msra.mxu0 0.0
    %91 = vmatprep.subr.mxu0 0.0
    %92 = vmatpush1.msra.mxu0 0.0
    %93 = vmatprep.subr.mxu0 0.0
    %94 = vmatpush1.msra.mxu0 0.0
    %95 = vmatprep.subr.mxu0 0.0
    %96 = vmatpush1.msra.mxu0 0.0
    %97 = vmatprep.subr.mxu0 0.0
    %98 = vmatpush1.msra.mxu0 0.0
    %99 = vmatprep.subr.mxu0 0.0
    %100 = vmatpush1.msra.mxu0 0.0
    %101 = vmatprep.subr.mxu0 0.0
    %102 = vmatpush1.msra.mxu0 0.0
    %103 = vmatprep.subr.mxu0 0.0
    %104 = vmatpush1.msra.mxu0 0.0
    %105 = vmatprep.subr.mxu0 0.0
    %106 = vmatpush1.msra.mxu0 0.0
    %107 = vmatprep.subr.mxu0 0.0
    %108 = vmatpush1.msra.mxu0 0.0
    %109 = vmatprep.subr.mxu0 0.0
    %110 = vmatpush1.msra.mxu0 0.0
    %111 = vmatprep.subr.mxu0 0.0
    %112 = vmatpush1.msra.mxu0 0.0
    %113 = vmatprep.subr.mxu0 0.0
    %114 = vmatpush1.msra.mxu0 0.0
    %115 = vmatprep.subr.mxu0 0.0
    %116 = vmatpush1.msra.mxu0 0.0
    %117 = vmatprep.subr.mxu0 0.0
    %118 = vmatpush1.msra.mxu0 0.0
    %119 = vmatprep.subr.mxu0 0.0
    %120 = vmatpush1.msra.mxu0 0.0
    %121 = vmatprep.subr.mxu0 0.0
    %122 = vmatpush1.msra.mxu0 0.0
    %123 = vmatprep.subr.mxu0 0.0
    %124 = vmatpush1.msra.mxu0 0.0
    %125 = vmatprep.subr.mxu0 0.0
    %126 = vmatpush1.msra.mxu0 0.0
    %127 = vmatprep.subr.mxu0 0.0
    %128 = vmatpush1.msra.mxu0 0.0
    %129 = vmatprep.subr.mxu0 0.0
    %130 = vmatpush1.msra.mxu0 0.0
    %131 = vmatprep.subr.mxu0 0.0
    %132 = vmatpush1.msra.mxu0 0.0
    %133 = vmatprep.subr.mxu0 0.0
    %134 = vmatpush1.msra.mxu0 0.0
    %135 = vmatprep.mubr.f32.mxu0 0.0
    %136 = vmatmul.mubr.f32.gmra.mrb[0].mxu0 %v66
    %v137 = vpop.f32.mrb[0].mxu0
    %v138 = vadd.f32 %v62, %v137
    %v139 = vpop.f32.mrb[0].mxu0
    %140 = vmatprep.mubr.f32.mxu0 0.0
    %141 = vmatmul.mubr.f32.gmra.mrb[0].mxu0 %v69
    %v142 = vpop.f32.mrb[0].mxu0
    %v143 = vadd.f32 %v62, %v142
    %v144 = vpop.f32.mrb[0].mxu0
    %145 = vdwg.mxu0
    %v146 = vmul.f32 %v138, 0.5
    %v147 = vmul.f32 %v143, 0.5
    %v148 = vrcp.pop 1.41421
    %v149 = vmul.f32 %v138, %v148
    %v150 = vmul.f32 %v143, %v148
    %v151 = verf.f32.pop %v149
    %v152 = verf.f32.pop %v150
    %v153 = vadd.f32 %v151, 1.0
    %v154 = vadd.f32 %v152, 1.0
    %v155 = vmul.f32 %v146, %v153
    %v156 = vmul.f32 %v147, %v154
    %v157 = vld [vmem:[%s3] sm:$0x1]
    %v159 = vlaneseq
    %v160 = vshrl.u32 %v159, 7
    %v161 = vsub.s32 0, %v160
    %v162 = vrot.slane %v157, %v161
    %v164 = vmul.f32 %v155, %v162
    %v165 = vmul.f32 %v156, %v162
    %v166 = vsel %vm64, %v164, 0.0
    %167 = vadd.xlane.f32.xlu0 %v166
    %v168 = vpop.xlane.xlu0 %167
    %v169 = vsel %vm64, %v165, 0.0
    %170 = vadd.xlane.f32.xlu0 %v169
    %v171 = vpop.xlane.xlu0 %170
    %v172 = vld [vmem:[#allocation2] sm:$0x1]
    %s173 = vtos %v172
    %v174 = vstv %s173
    %v175 = vadd.f32 %v168, %v174
    %v176 = vadd.f32 %v171, %v174
    %v179 = vlaneseq
    %v180 = vand.u32 %v179, 127
    %v181 = vlaneseq
    %v182 = vshrl.u32 %v181, 7
    %v183 = vsub.s32 %v180, %v182
    %v184 = vrot.slane %v175, %v183
    %v185 = vadd.s32 %v180, 4294967288
    %v186 = vlaneseq
    %v187 = vshrl.u32 %v186, 7
    %v188 = vsub.s32 %v185, %v187
    %v189 = vrot.slane %v176, %v188
    %vm190 = vcmask 130112
    %v191 = vsel %vm190, %v189, %v184
    %vm193 = vcmask 122880
    %194 = vst.msk [vmem:[#allocation8] sm:$0x1] %vm193, %v191
    // Predicated region
    $region30: #{tpu_custom_call.1} parent=1 // pred_check
      _
    $region31: #{tpu_custom_call.1} parent=1 // pred_check_branch
      %196 = sbr.rel (0) target = $region33
    $region32: #{tpu_custom_call.1} parent=1 // pred_region
      %s198 = ssub.s32 16, 16
      %199 = vsyncadd [#allocation5], %s198
      %s201 = sshll.u32 [#allocation8], 4
      %s202 = int_to_ptr.vmem [resolvable:$true] %s201
      %204 = dma.vmem_to_hbm [thread:$0]  %s202, 16, %s5, [#allocation5]
    $region33: #{tpu_custom_call.1} parent=1 // pred_fallthru
      _
    // Predicated region
    $region34: #{tpu_custom_call.1} parent=1 // pred_check
      _
    $region35: #{tpu_custom_call.1} parent=1 // pred_check_branch
      %206 = sbr.rel (0) target = $region37
    $region36: #{tpu_custom_call.1} parent=1 // pred_region
      %207 = dma.done [#allocation5], 16
    $region37: #{tpu_custom_call.1} parent=1 // pred_fallthru
      _
    %208 = vsyncpa [#allocation4], 1
    %209 = vsyncpa [#allocation7], 1
    %210 = vsyncpa [#allocation5], 1

</llo_original>
